<compile_context>
chip_gen: v7x
topology: tpu7x:2x2x1
jax: 0.10.0
libtpu: 0.0.40
codegen_flags: <defaults>
</compile_context>

<pallas_src>
import jax
import jax.numpy as jnp
from jax.experimental import pallas as pl
from jax.experimental.pallas import tpu as pltpu

NUM_STATE = 2     # MountainCar-v0 observation dim
NUM_ACTION = 3    # MountainCar-v0 action dim
HIDDEN = 64
W2_ROWS = 8                      # num_action padded to a sublane multiple
PARAM_ROWS = HIDDEN + W2_ROWS    # 72 rows (multiple of 8)
LANE = 128
MAX_TILE = 512                   # batch (lane) tile per grid step


def actor_kernel(p_ref, x_ref, out_ref):
    # p_ref  : (72, 128) packed parameter slab (resident across the grid)
    # x_ref  : (2, TB)   observations, batch on lanes
    # out_ref: (3, TB)   action probabilities, batch on lanes
    x = x_ref[...]                                          # (2, TB)

    # ---- fc1 as a VPU broadcast-MAC (K=2 -> MXU would be ~98% padding) ----
    w1c0 = p_ref[0:HIDDEN, 0:1]                             # (64, 1)
    w1c1 = p_ref[0:HIDDEN, 1:2]                             # (64, 1)
    b1 = p_ref[0:HIDDEN, 2:3]                               # (64, 1)
    h = w1c0 * x[0:1, :] + w1c1 * x[1:2, :] + b1            # (64, TB)

    # leaky_relu (negative_slope=0.01): one vmul + one vmax
    h = jnp.maximum(h, 0.01 * h)

    # ---- action_head on the MXU: (8,64)@(64,TB); rows 3..7 are zeros ----
    w2t = p_ref[HIDDEN:HIDDEN + W2_ROWS, 0:HIDDEN]          # (8, 64)
    b2 = p_ref[HIDDEN:HIDDEN + W2_ROWS, HIDDEN:HIDDEN + 1]  # (8, 1)
    logits8 = jnp.dot(w2t, h, preferred_element_type=jnp.float32) + b2
    l = logits8[0:NUM_ACTION, :]                            # (3, TB)

    # ---- softmax over the 3 action rows, unrolled on the VPU ----
    m = jnp.maximum(jnp.maximum(l[0:1, :], l[1:2, :]), l[2:3, :])   # (1, TB)
    e = jnp.exp(l - m)                                      # (3, TB), EUP
    denom = e[0:1, :] + e[1:2, :] + e[2:3, :]               # (1, TB)
    # EUP approx reciprocal (free slot) + one Newton step -> ~f32-exact
    r = pl.reciprocal(denom, approx=True)
    r = r * (2.0 - denom * r)
    out_ref[...] = e * r                                    # lane-dense store


def _round_up(n, m):
    return ((n + m - 1) // m) * m


def pack_params(w1, b1, w2, b2):
    """Pack all Actor parameters into one (72, 128) f32 slab (single DMA)."""
    slab = jnp.zeros((PARAM_ROWS, LANE), jnp.float32)
    slab = slab.at[0:HIDDEN, 0:NUM_STATE].set(w1.T.astype(jnp.float32))
    slab = slab.at[0:HIDDEN, NUM_STATE:NUM_STATE + 1].set(
        b1.reshape(HIDDEN, 1).astype(jnp.float32))
    slab = slab.at[HIDDEN:HIDDEN + NUM_ACTION, 0:HIDDEN].set(
        w2.T.astype(jnp.float32))
    slab = slab.at[HIDDEN:HIDDEN + NUM_ACTION, HIDDEN:HIDDEN + 1].set(
        b2.reshape(NUM_ACTION, 1).astype(jnp.float32))
    return slab


def actor_forward(x, w1, b1, w2, b2):
    """x: (B, num_state) float32 -> (B, num_action) action probabilities."""
    B = x.shape[0]
    slab = pack_params(w1, b1, w2, b2)

    # Put batch on the lane axis, pad to a lane-tile multiple.
    if B <= MAX_TILE:
        tb = _round_up(B, LANE)
        bp = tb
    else:
        tb = MAX_TILE
        bp = _round_up(B, MAX_TILE)
    xt = x.astype(jnp.float32).T                            # (2, B)
    if bp != B:
        xt = jnp.pad(xt, ((0, 0), (0, bp - B)))

    probs_t = pl.pallas_call(
        actor_kernel,
        out_shape=jax.ShapeDtypeStruct((NUM_ACTION, bp), jnp.float32),
        grid_spec=pltpu.PrefetchScalarGridSpec(
            num_scalar_prefetch=0,
            grid=(bp // tb,),
            in_specs=[
                # parameter slab: same block index every step -> stays resident
                pl.BlockSpec((PARAM_ROWS, LANE), lambda i: (0, 0)),
                # observations stream along the lane (batch) axis
                pl.BlockSpec((NUM_STATE, tb), lambda i: (0, i)),
            ],
            out_specs=pl.BlockSpec((NUM_ACTION, tb), lambda i: (0, i)),
        ),
        compiler_params=pltpu.CompilerParams(
            dimension_semantics=("parallel",)),
    )(slab, xt)

    return probs_t[:, :B].T                                 # (B, num_action)


def init_params(key):
    """PyTorch nn.Linear default init: U[-1/sqrt(fan_in), +1/sqrt(fan_in)]."""
    k1, k2, k3, k4 = jax.random.split(key, 4)
    bound1 = 1.0 / jnp.sqrt(NUM_STATE)
    bound2 = 1.0 / jnp.sqrt(HIDDEN)
    w1 = jax.random.uniform(k1, (NUM_STATE, HIDDEN), jnp.float32, -bound1, bound1)
    b1 = jax.random.uniform(k2, (1, HIDDEN), jnp.float32, -bound1, bound1)
    w2 = jax.random.uniform(k3, (HIDDEN, NUM_ACTION), jnp.float32, -bound2, bound2)
    b2 = jax.random.uniform(k4, (1, NUM_ACTION), jnp.float32, -bound2, bound2)
    return w1, b1, w2, b2


def reference_forward(x, w1, b1, w2, b2):
    h = x @ w1 + b1
    h = jnp.where(h >= 0, h, 0.01 * h)
    logits = h @ w2 + b2
    return jax.nn.softmax(logits, axis=-1)


if __name__ == "__main__":
    key = jax.random.PRNGKey(0)
    k_params, k_x1, k_x2 = jax.random.split(key, 3)

    w1, b1, w2, b2 = init_params(k_params)
    fwd = jax.jit(actor_forward)

    # small batch (single tile, padded lanes) and multi-tile batch (grid of 2)
    for name, B, kx in (("small", 8, k_x1), ("multi_tile", 640, k_x2)):
        x = jax.random.normal(kx, (B, NUM_STATE), jnp.float32)
        probs = fwd(x, w1, b1, w2, b2)
        jax.block_until_ready(probs)

        ref = reference_forward(x, w1, b1, w2, b2)
        assert probs.shape == (B, NUM_ACTION), name
        assert jnp.allclose(probs, ref, atol=1e-4, rtol=1e-4), name
        assert jnp.allclose(jnp.sum(probs, axis=-1), jnp.ones((B,)),
                            atol=1e-4), name

    print("KERNEL_OK")
</pallas_src>

<mosaic_0001>
module attributes {stable_mosaic.version = 11 : i64} {
  func.func @actor_kernel(%arg0: i32, %arg1: memref<72x128xf32, #tpu.memory_space<vmem>>, %arg2: memref<2x128xf32, #tpu.memory_space<vmem>>, %arg3: memref<3x128xf32, #tpu.memory_space<vmem>>) attributes {dimension_semantics = [#tpu.dimension_semantics<parallel>], iteration_bounds = array<i64: 1>, scalar_prefetch = 0 : i64, scratch_operands = 0 : i64, tpu.core_type = #tpu.core_type<tc>, window_params = [{pipeline_mode = #tpu.pipeline_mode<synchronous>, transform_indices = @transform_0, window_bounds = array<i64: 72, 128>}, {transform_indices = @transform_1, window_bounds = array<i64: 2, 128>}, {transform_indices = @transform_2, window_bounds = array<i64: 3, 128>}]} {
    %c0 = arith.constant 0 : index
    %c0_0 = arith.constant 0 : index
    %0 = vector.load %arg2[%c0, %c0_0] : memref<2x128xf32, #tpu.memory_space<vmem>>, vector<2x128xf32>
    %c0_1 = arith.constant 0 : index
    %c0_2 = arith.constant 0 : index
    %1 = vector.load %arg1[%c0_1, %c0_2] : memref<72x128xf32, #tpu.memory_space<vmem>>, vector<64x1xf32>
    %c0_3 = arith.constant 0 : index
    %c1 = arith.constant 1 : index
    %2 = vector.load %arg1[%c0_3, %c1] : memref<72x128xf32, #tpu.memory_space<vmem>>, vector<64x1xf32>
    %c0_4 = arith.constant 0 : index
    %c2 = arith.constant 2 : index
    %3 = vector.load %arg1[%c0_4, %c2] : memref<72x128xf32, #tpu.memory_space<vmem>>, vector<64x1xf32>
    %4 = vector.extract_strided_slice %0 {offsets = [0, 0], sizes = [1, 128], strides = [1, 1]} : vector<2x128xf32> to vector<1x128xf32>
    %5 = vector.broadcast %1 : vector<64x1xf32> to vector<64x128xf32>
    %6 = vector.broadcast %4 : vector<1x128xf32> to vector<64x128xf32>
    %7 = arith.mulf %5, %6 : vector<64x128xf32>
    %8 = vector.extract_strided_slice %0 {offsets = [1, 0], sizes = [1, 128], strides = [1, 1]} : vector<2x128xf32> to vector<1x128xf32>
    %9 = vector.broadcast %2 : vector<64x1xf32> to vector<64x128xf32>
    %10 = vector.broadcast %8 : vector<1x128xf32> to vector<64x128xf32>
    %11 = arith.mulf %9, %10 : vector<64x128xf32>
    %12 = arith.addf %7, %11 : vector<64x128xf32>
    %13 = vector.broadcast %3 : vector<64x1xf32> to vector<64x128xf32>
    %14 = arith.addf %12, %13 : vector<64x128xf32>
    %cst = arith.constant 0.00999999977 : f32
    %15 = vector.broadcast %cst : f32 to vector<64x128xf32>
    %16 = arith.mulf %15, %14 : vector<64x128xf32>
    %17 = arith.maximumf %14, %16 : vector<64x128xf32>
    %c64 = arith.constant 64 : index
    %c0_5 = arith.constant 0 : index
    %18 = vector.load %arg1[%c64, %c0_5] : memref<72x128xf32, #tpu.memory_space<vmem>>, vector<8x64xf32>
    %c64_6 = arith.constant 64 : index
    %c64_7 = arith.constant 64 : index
    %19 = vector.load %arg1[%c64_6, %c64_7] : memref<72x128xf32, #tpu.memory_space<vmem>>, vector<8x1xf32>
    %cst_8 = arith.constant dense<0.000000e+00> : vector<8x128xf32>
    %20 = tpu.matmul %18, %17, %cst_8 {dimension_numbers = #tpu.dot_dimension_numbers<[1], [0], [0], [1], [0, 0, 1, 1], [], []>} : vector<8x64xf32>, vector<64x128xf32>, vector<8x128xf32> -> vector<8x128xf32>
    %21 = vector.broadcast %19 : vector<8x1xf32> to vector<8x128xf32>
    %22 = arith.addf %20, %21 : vector<8x128xf32>
    %23 = vector.extract_strided_slice %22 {offsets = [0, 0], sizes = [3, 128], strides = [1, 1]} : vector<8x128xf32> to vector<3x128xf32>
    %24 = vector.extract_strided_slice %23 {offsets = [0, 0], sizes = [1, 128], strides = [1, 1]} : vector<3x128xf32> to vector<1x128xf32>
    %25 = vector.extract_strided_slice %23 {offsets = [1, 0], sizes = [1, 128], strides = [1, 1]} : vector<3x128xf32> to vector<1x128xf32>
    %26 = arith.maximumf %24, %25 : vector<1x128xf32>
    %27 = vector.extract_strided_slice %23 {offsets = [2, 0], sizes = [1, 128], strides = [1, 1]} : vector<3x128xf32> to vector<1x128xf32>
    %28 = arith.maximumf %26, %27 : vector<1x128xf32>
    %29 = vector.broadcast %28 : vector<1x128xf32> to vector<3x128xf32>
    %30 = arith.subf %23, %29 : vector<3x128xf32>
    %31 = math.exp %30 : vector<3x128xf32>
    %32 = vector.extract_strided_slice %31 {offsets = [0, 0], sizes = [1, 128], strides = [1, 1]} : vector<3x128xf32> to vector<1x128xf32>
    %33 = vector.extract_strided_slice %31 {offsets = [1, 0], sizes = [1, 128], strides = [1, 1]} : vector<3x128xf32> to vector<1x128xf32>
    %34 = arith.addf %32, %33 : vector<1x128xf32>
    %35 = vector.extract_strided_slice %31 {offsets = [2, 0], sizes = [1, 128], strides = [1, 1]} : vector<3x128xf32> to vector<1x128xf32>
    %36 = arith.addf %34, %35 : vector<1x128xf32>
    %37 = tpu.reciprocal %36 {approx = true} : vector<1x128xf32> -> vector<1x128xf32>
    %38 = arith.mulf %36, %37 : vector<1x128xf32>
    %cst_9 = arith.constant 2.000000e+00 : f32
    %39 = vector.broadcast %cst_9 : f32 to vector<1x128xf32>
    %40 = arith.subf %39, %38 : vector<1x128xf32>
    %41 = arith.mulf %37, %40 : vector<1x128xf32>
    %42 = vector.broadcast %41 : vector<1x128xf32> to vector<3x128xf32>
    %43 = arith.mulf %31, %42 : vector<3x128xf32>
    %c0_10 = arith.constant 0 : index
    %c0_11 = arith.constant 0 : index
    %44 = vector.load %arg3[%c0_10, %c0_11] : memref<3x128xf32, #tpu.memory_space<vmem>>, vector<3x128xf32>
    tpu.vector_store %arg3[%c0_10, %c0_11], %43 {strides = array<i32>} : memref<3x128xf32, #tpu.memory_space<vmem>>, vector<3x128xf32>,
    return
  }
  func.func @transform_0(%arg0: i32) -> (i32, i32) {
    %c0_i32 = arith.constant 0 : i32
    %c0_i32_0 = arith.constant 0 : i32
    %c0_i32_1 = arith.constant 0 : i32
    return %c0_i32, %c0_i32_0 : i32, i32
  }
  func.func @transform_1(%arg0: i32) -> (i32, i32) {
    %c0_i32 = arith.constant 0 : i32
    %c0_i32_0 = arith.constant 0 : i32
    return %c0_i32, %arg0 : i32, i32
  }
  func.func @transform_2(%arg0: i32) -> (i32, i32) {
    %c0_i32 = arith.constant 0 : i32
    %c0_i32_0 = arith.constant 0 : i32
    return %c0_i32, %arg0 : i32, i32
  }
}

</mosaic_0001>

<llo_original>
// kernel: actor_forward.1
$region0: #{actor_forward.1}
  #allocation0 [shape = 'u32[]', space=smem, size = 0x4, offset = 0x4, fixed_abs, tag = 'smem constant byte address 0x4 - core index']
  #allocation1 [shape = 'u32[144,128]{1,0:T(1,128)}', space=vmem, size = 0x12000, scoped, tag = 'internal scratch']
  %s0 = inlined_call_operand.vmem [shape: f32[72,128], index: 0, kind: input, shape index: {}]
  %s1 = inlined_call_operand.vmem [shape: f32[2,128], index: 1, kind: input, shape index: {}]
  %s2 = inlined_call_operand.vmem [shape: f32[3,128], index: 2, kind: output, shape index: {}]
  %s3 = sld [smem:[#allocation0]]
  $region18: #{actor_forward.1} parent=0
    _
  %s5 = ssub.s32 1, %s3
  %s6 = scalar_select 0, %s5, %s3
  // Predicated region
  $region2: #{actor_forward.1} parent=0 // pred_check
    _
  $region3: #{actor_forward.1} parent=0 // pred_check_branch
    %8 = sbr.rel (0) target = $region5
  $region4: #{actor_forward.1} parent=0 // pred_region
    _
  $region5: #{actor_forward.1} parent=0 // pred_fallthru
    _
  // Predicated region
  $region6: #{actor_forward.1} parent=0 // pred_check
    _
  $region7: #{actor_forward.1} parent=0 // pred_check_branch
    %10 = sbr.rel (0) target = $region9
  $region8: #{actor_forward.1} parent=0 // pred_region
    _
  $region9: #{actor_forward.1} parent=0 // pred_fallthru
    _
  %v11 = vld [vmem:[%s1] sm:$0x3]
  %v12 = vld [vmem:[%s0] sm:$0xff]
  %v13 = vld [vmem:[%s0 + $0x8] sm:$0xff]
  %v14 = vld [vmem:[%s0 + $0x10] sm:$0xff]
  %v15 = vld [vmem:[%s0 + $0x18] sm:$0xff]
  %v16 = vld [vmem:[%s0 + $0x20] sm:$0xff]
  %v17 = vld [vmem:[%s0 + $0x28] sm:$0xff]
  %v18 = vld [vmem:[%s0 + $0x30] sm:$0xff]
  %v19 = vld [vmem:[%s0 + $0x38] sm:$0xff]
  %21 = vset.pattern.permute.xlu0 0
  %22 = vperm.xlu0 %21, %v12
  %v23 = vpop.permute.xlu0 %22
  %26 = vset.pattern.permute.xlu0 0
  %27 = vperm.xlu0 %26, %v13
  %v28 = vpop.permute.xlu0 %27
  %31 = vset.pattern.permute.xlu0 0
  %32 = vperm.xlu0 %31, %v14
  %v33 = vpop.permute.xlu0 %32
  %36 = vset.pattern.permute.xlu0 0
  %37 = vperm.xlu0 %36, %v15
  %v38 = vpop.permute.xlu0 %37
  %41 = vset.pattern.permute.xlu0 0
  %42 = vperm.xlu0 %41, %v16
  %v43 = vpop.permute.xlu0 %42
  %46 = vset.pattern.permute.xlu0 0
  %47 = vperm.xlu0 %46, %v17
  %v48 = vpop.permute.xlu0 %47
  %51 = vset.pattern.permute.xlu0 0
  %52 = vperm.xlu0 %51, %v18
  %v53 = vpop.permute.xlu0 %52
  %56 = vset.pattern.permute.xlu0 0
  %57 = vperm.xlu0 %56, %v19
  %v58 = vpop.permute.xlu0 %57
  %v60 = vlaneseq
  %v61 = vshrl.u32 %v60, 7
  %v62 = vsub.s32 0, %v61
  %v63 = vrot.slane %v11, %v62
  %v64 = vmul.f32 %v23, %v63
  %v65 = vmul.f32 %v28, %v63
  %v66 = vmul.f32 %v33, %v63
  %v67 = vmul.f32 %v38, %v63
  %v68 = vmul.f32 %v43, %v63
  %v69 = vmul.f32 %v48, %v63
  %v70 = vmul.f32 %v53, %v63
  %v71 = vmul.f32 %v58, %v63
  %72 = vset.pattern.permute.xlu0 1
  %73 = vperm.xlu0 %72, %v12
  %v74 = vpop.permute.xlu0 %73
  %76 = vset.pattern.permute.xlu0 1
  %77 = vperm.xlu0 %76, %v13
  %v78 = vpop.permute.xlu0 %77
  %80 = vset.pattern.permute.xlu0 1
  %81 = vperm.xlu0 %80, %v14
  %v82 = vpop.permute.xlu0 %81
  %84 = vset.pattern.permute.xlu0 1
  %85 = vperm.xlu0 %84, %v15
  %v86 = vpop.permute.xlu0 %85
  %88 = vset.pattern.permute.xlu0 1
  %89 = vperm.xlu0 %88, %v16
  %v90 = vpop.permute.xlu0 %89
  %92 = vset.pattern.permute.xlu0 1
  %93 = vperm.xlu0 %92, %v17
  %v94 = vpop.permute.xlu0 %93
  %96 = vset.pattern.permute.xlu0 1
  %97 = vperm.xlu0 %96, %v18
  %v98 = vpop.permute.xlu0 %97
  %100 = vset.pattern.permute.xlu0 1
  %101 = vperm.xlu0 %100, %v19
  %v102 = vpop.permute.xlu0 %101
  %v104 = vlaneseq
  %v105 = vshrl.u32 %v104, 7
  %v106 = vsub.s32 1, %v105
  %v107 = vrot.slane %v11, %v106
  %v108 = vmul.f32 %v74, %v107
  %v109 = vmul.f32 %v78, %v107
  %v110 = vmul.f32 %v82, %v107
  %v111 = vmul.f32 %v86, %v107
  %v112 = vmul.f32 %v90, %v107
  %v113 = vmul.f32 %v94, %v107
  %v114 = vmul.f32 %v98, %v107
  %v115 = vmul.f32 %v102, %v107
  %v116 = vadd.f32 %v64, %v108
  %v117 = vadd.f32 %v65, %v109
  %v118 = vadd.f32 %v66, %v110
  %v119 = vadd.f32 %v67, %v111
  %v120 = vadd.f32 %v68, %v112
  %v121 = vadd.f32 %v69, %v113
  %v122 = vadd.f32 %v70, %v114
  %v123 = vadd.f32 %v71, %v115
  %124 = vset.pattern.permute.xlu0 2
  %125 = vperm.xlu0 %124, %v12
  %v126 = vpop.permute.xlu0 %125
  %128 = vset.pattern.permute.xlu0 2
  %129 = vperm.xlu0 %128, %v13
  %v130 = vpop.permute.xlu0 %129
  %132 = vset.pattern.permute.xlu0 2
  %133 = vperm.xlu0 %132, %v14
  %v134 = vpop.permute.xlu0 %133
  %136 = vset.pattern.permute.xlu0 2
  %137 = vperm.xlu0 %136, %v15
  %v138 = vpop.permute.xlu0 %137
  %140 = vset.pattern.permute.xlu0 2
  %141 = vperm.xlu0 %140, %v16
  %v142 = vpop.permute.xlu0 %141
  %144 = vset.pattern.permute.xlu0 2
  %145 = vperm.xlu0 %144, %v17
  %v146 = vpop.permute.xlu0 %145
  %148 = vset.pattern.permute.xlu0 2
  %149 = vperm.xlu0 %148, %v18
  %v150 = vpop.permute.xlu0 %149
  %152 = vset.pattern.permute.xlu0 2
  %153 = vperm.xlu0 %152, %v19
  %v154 = vpop.permute.xlu0 %153
  %v156 = vadd.f32 %v116, %v126
  %v157 = vadd.f32 %v117, %v130
  %v158 = vadd.f32 %v118, %v134
  %v159 = vadd.f32 %v119, %v138
  %v160 = vadd.f32 %v120, %v142
  %v161 = vadd.f32 %v121, %v146
  %v162 = vadd.f32 %v122, %v150
  %v163 = vadd.f32 %v123, %v154
  %v164 = vmul.f32 %v156, 0.01
  %v165 = vmul.f32 %v157, 0.01
  %v166 = vmul.f32 %v158, 0.01
  %v167 = vmul.f32 %v159, 0.01
  %v168 = vmul.f32 %v160, 0.01
  %v169 = vmul.f32 %v161, 0.01
  %v170 = vmul.f32 %v162, 0.01
  %v171 = vmul.f32 %v163, 0.01
  %v172 = vmax.f32 %v156, %v164
  %v173 = vmax.f32 %v157, %v165
  %v174 = vmax.f32 %v158, %v166
  %v175 = vmax.f32 %v159, %v167
  %v176 = vmax.f32 %v160, %v168
  %v177 = vmax.f32 %v161, %v169
  %v178 = vmax.f32 %v162, %v170
  %v179 = vmax.f32 %v163, %v171
  %v180 = vld [vmem:[%s0 + $0x40] sm:$0xff]
  %182 = vset.pattern.permute.xlu0 64
  %183 = vperm.xlu0 %182, %v180
  %v184 = vpop.permute.xlu0 %183
  %vm186 = vcmask 523264
  %v187 = vsel %vm186, %v180, 0
  %189 = vmatprep.subr.mxu0 0.0
  %190 = vmatpush1.msra.mxu0 %v172
  %191 = vmatprep.subr.mxu0 0.0
  %192 = vmatpush1.msra.mxu0 %v173
  %193 = vmatprep.subr.mxu0 0.0
  %194 = vmatpush1.msra.mxu0 %v174
  %195 = vmatprep.subr.mxu0 0.0
  %196 = vmatpush1.msra.mxu0 %v175
  %197 = vmatprep.subr.mxu0 0.0
  %198 = vmatpush1.msra.mxu0 %v176
  %199 = vmatprep.subr.mxu0 0.0
  %200 = vmatpush1.msra.mxu0 %v177
  %201 = vmatprep.subr.mxu0 0.0
  %202 = vmatpush1.msra.mxu0 %v178
  %203 = vmatprep.subr.mxu0 0.0
  %204 = vmatpush1.msra.mxu0 %v179
  %205 = vmatprep.subr.mxu0 0.0
  %206 = vmatpush1.msra.mxu0 0.0
  %207 = vmatprep.subr.mxu0 0.0
  %208 = vmatpush1.msra.mxu0 0.0
  %209 = vmatprep.subr.mxu0 0.0
  %210 = vmatpush1.msra.mxu0 0.0
  %211 = vmatprep.subr.mxu0 0.0
  %212 = vmatpush1.msra.mxu0 0.0
  %213 = vmatprep.subr.mxu0 0.0
  %214 = vmatpush1.msra.mxu0 0.0
  %215 = vmatprep.subr.mxu0 0.0
  %216 = vmatpush1.msra.mxu0 0.0
  %217 = vmatprep.subr.mxu0 0.0
  %218 = vmatpush1.msra.mxu0 0.0
  %219 = vmatprep.subr.mxu0 0.0
  %220 = vmatpush1.msra.mxu0 0.0
  %221 = vmatprep.subr.mxu0 0.0
  %222 = vmatpush1.msra.mxu0 0.0
  %223 = vmatprep.subr.mxu0 0.0
  %224 = vmatpush1.msra.mxu0 0.0
  %225 = vmatprep.subr.mxu0 0.0
  %226 = vmatpush1.msra.mxu0 0.0
  %227 = vmatprep.subr.mxu0 0.0
  %228 = vmatpush1.msra.mxu0 0.0
  %229 = vmatprep.subr.mxu0 0.0
  %230 = vmatpush1.msra.mxu0 0.0
  %231 = vmatprep.subr.mxu0 0.0
  %232 = vmatpush1.msra.mxu0 0.0
  %233 = vmatprep.subr.mxu0 0.0
  %234 = vmatpush1.msra.mxu0 0.0
  %235 = vmatprep.subr.mxu0 0.0
  %236 = vmatpush1.msra.mxu0 0.0
  %237 = vmatprep.subr.mxu0 0.0
  %238 = vmatpush1.msra.mxu0 0.0
  %239 = vmatprep.subr.mxu0 0.0
  %240 = vmatpush1.msra.mxu0 0.0
  %241 = vmatprep.subr.mxu0 0.0
  %242 = vmatpush1.msra.mxu0 0.0
  %243 = vmatprep.subr.mxu0 0.0
  %244 = vmatpush1.msra.mxu0 0.0
  %245 = vmatprep.subr.mxu0 0.0
  %246 = vmatpush1.msra.mxu0 0.0
  %247 = vmatprep.subr.mxu0 0.0
  %248 = vmatpush1.msra.mxu0 0.0
  %249 = vmatprep.subr.mxu0 0.0
  %250 = vmatpush1.msra.mxu0 0.0
  %251 = vmatprep.subr.mxu0 0.0
  %252 = vmatpush1.msra.mxu0 0.0
  %253 = vmatprep.mubr.f32.mxu0 0.0
  %254 = vmatmul.mubr.f32.gmra.mrb[0].mxu0 %v187
  %v255 = vpop.f32.mrb[0].mxu0
  %v256 = vadd.f32 %v184, %v255
  %v257 = vpop.f32.mrb[0].mxu0
  %258 = vdwg.mxu0
  %v260 = vrot.slane %v256, 1
  %v262 = vmax.f32 %v256, %v260
  %v263 = vrot.slane %v256, 2
  %v265 = vmax.f32 %v262, %v263
  %v266 = vlaneseq
  %v267 = vshrl.u32 %v266, 7
  %v268 = vsub.s32 0, %v267
  %v269 = vrot.slane %v265, %v268
  %v270 = vsub.f32 %v256, %v269
  %v271 = vmul.f32 %v270, 1.442695
  %v272 = vpow.pop %v271
  %v274 = vrot.slane %v272, 1
  %v276 = vadd.f32 %v272, %v274
  %v277 = vrot.slane %v272, 2
  %v279 = vadd.f32 %v276, %v277
  %v280 = vrcp.pop %v279
  %v281 = vmul.f32 %v279, %v280
  %v282 = vsub.f32 2.0, %v281
  %v283 = vmul.f32 %v280, %v282
  %v284 = vlaneseq
  %v285 = vshrl.u32 %v284, 7
  %v286 = vsub.s32 0, %v285
  %v287 = vrot.slane %v283, %v286
  %v288 = vmul.f32 %v272, %v287
  %289 = vst [vmem:[%s2] sm:$0x7] %v288
  // Predicated region
  $region10: #{actor_forward.1} parent=0 // pred_check
    _
  $region11: #{actor_forward.1} parent=0 // pred_check_branch
    %291 = sbr.rel (0) target = $region13
  $region12: #{actor_forward.1} parent=0 // pred_region
    _
  $region13: #{actor_forward.1} parent=0 // pred_fallthru
    _
  // Predicated region
  $region14: #{actor_forward.1} parent=0 // pred_check
    _
  $region15: #{actor_forward.1} parent=0 // pred_check_branch
    %293 = sbr.rel (0) target = $region17
  $region16: #{actor_forward.1} parent=0 // pred_region
    _
  $region17: #{actor_forward.1} parent=0 // pred_fallthru
    _

</llo_original>
